<compile_context>
chip_gen: v7x
topology: tpu7x:2x2x1
jax: 0.10.0
libtpu: 0.0.40
codegen_flags: <defaults>
</compile_context>

<pallas_src>
import math

import jax
import jax.numpy as jnp
from jax.experimental import pallas as pl
from jax.experimental.pallas import tpu as pltpu

_LANE = 128
_SUB = 8
_MAX_TR = 4096                      # rows/block: 4096*128*4 B = 2 MiB per operand per buffer
_VMEM_LIMIT = 48 * 1024 * 1024      # 5 operands x 2 buffers x 2 MiB ~= 20 MiB + headroom (< v7x 64 MiB/TC)


def _energy_kernel(x_ref, a_ref, y_ref, p_ref, z_ref, s1_ref, s2_ref):
    """Fused e1/e2 partial-sum accumulation over one (tr, 128) row block."""
    # s1_ref / s2_ref are the per-core resident (8, 128) accumulator blocks.
    @pl.when(pl.program_id(1) == 0)
    def _():
        s1_ref[...] = jnp.zeros_like(s1_ref)
        s2_ref[...] = jnp.zeros_like(s2_ref)

    # Native-dtype DMA; cast to f32 in-register for accumulation.
    xv = x_ref[...].astype(jnp.float32)
    av = a_ref[...].astype(jnp.float32)
    yv = y_ref[...].astype(jnp.float32)
    pv = p_ref[...].astype(jnp.float32)
    zv = z_ref[...].astype(jnp.float32)

    e1 = xv * av                      # x * alpha
    d = zv - yv
    e2 = (yv + pv) * (d * d)          # (y + p) * (z - y) ** 2

    # (tr, 128) -> (tr//8, 8, 128) matches the native vreg tiling, so this lowers
    # to a chain of VPU adds into the resident (8, 128) accumulators; the single
    # cross-lane/cross-sublane reduce is deferred to the wrapper.
    s1_ref[...] += e1.reshape(-1, _SUB, _LANE).sum(axis=0)
    s2_ref[...] += e2.reshape(-1, _SUB, _LANE).sum(axis=0)


def _pick_tr(rows_img):
    """Largest multiple-of-8 divisor of rows_img that is <= _MAX_TR."""
    cap = min(_MAX_TR, rows_img)
    for cand in range(cap - cap % _SUB, 0, -_SUB):
        if rows_img % cand == 0:
            return cand
    return _SUB


def _tensorcores_per_chip():
    """Best-effort TensorCore count (2 on v7x megacore, 1 on v5e/v6e)."""
    try:
        info = pltpu.get_tpu_info()
        for name in ("num_tensorcores", "tensorcores_per_chip", "num_cores",
                     "cores_per_chip"):
            val = getattr(info, name, None)
            if isinstance(val, int) and val > 0:
                return max(1, min(2, val))
    except Exception:
        pass
    # Harmless fallback on single-TC chips: just one extra loop split, no padding.
    return 2


def _flatten_pad(a, rows):
    flat = a.reshape(-1)
    pad = rows * _LANE - flat.shape[0]
    if pad:
        flat = jnp.pad(flat, (0, pad))       # zeros add exactly 0 to both partial sums
    return flat.reshape(rows, _LANE)


def energy_loss(x, alpha, y, p, z):
    """EnergyLoss.forward: mean(x * alpha) + mean((y + p) * (z[0] - y) ** 2).

    `alpha` stands in for compute_alpha(z, c).
    """
    # TODO(synk): compute_alpha(z, c) is undefined in the DoubleDIP source; the
    # wrapper takes the alpha map as a precomputed input.  If it were elementwise
    # it should be fused in-kernel (take c instead of alpha) to save a full HBM
    # round-trip.
    z = jax.lax.stop_gradient(z)             # torch_to_np(z): detach

    n1 = math.prod(x.shape)
    n2 = math.prod(y.shape)
    assert n1 == n2 and y.shape == p.shape == z.shape, (
        "EnergyLoss kernel expects x/alpha and y/p/z to share one image shape")

    batch = z.shape[0]
    nz = n2 // batch                          # elements of one image (the z[0] slab)

    aligned = n2 > 0 and nz % (_SUB * _LANE) == 0
    if aligned:
        # Fast path: pure bitcast reshapes -> no pad copy, no z batch-broadcast copy.
        rows = n2 // _LANE
        rows_img = nz // _LANE
        tr = _pick_tr(rows_img)               # tr | rows_img  =>  exact tiling, no masking
        blocks_img = rows_img // tr
        blocks = rows // tr                   # == batch * blocks_img
        ops = [a.reshape(rows, _LANE) for a in (x, alpha, y, p)]
        # z stays at its original size in HBM; its index_map only ever touches the
        # rows of z[0] (wraps modulo blocks_img), so no batch replica is created.
        z2 = z.reshape(rows, _LANE)
    else:
        # Slow fallback for image sizes that are not (8*128)-aligned: materialize
        # the batch broadcast of z and zero-pad every operand (extra HBM copies).
        z_full = jnp.broadcast_to(z[:1], y.shape)
        rows_raw = pl.cdiv(max(n2, 1), _LANE)
        tr = min(_MAX_TR, ((max(rows_raw, _SUB) + _SUB - 1) // _SUB) * _SUB)
        blocks = pl.cdiv(rows_raw, tr)
        rows = blocks * tr
        blocks_img = blocks                   # z already batch-expanded: no wrap
        ops = [_flatten_pad(a, rows) for a in (x, alpha, y, p)]
        z2 = _flatten_pad(z_full, rows)

    nc = _tensorcores_per_chip()
    if blocks % nc != 0:                      # keep the tiling exact (never pad/clamp)
        nc = 1
    steps = blocks // nc

    def _row_map(c, i):
        return (c * steps + i, 0)

    if blocks_img == blocks:
        _z_map = _row_map                     # no batch replication to undo
    elif blocks_img == 1:
        _z_map = lambda c, i: (0, 0)          # one resident z block, fetched once
    else:
        _z_map = lambda c, i: ((c * steps + i) % blocks_img, 0)

    in_spec = pl.BlockSpec((tr, _LANE), _row_map)
    z_spec = pl.BlockSpec((tr, _LANE), _z_map)
    out_spec = pl.BlockSpec((_SUB, _LANE), lambda c, i: (c, 0))   # per-core accumulator

    # TODO(synk): on v7x confirm the leading "parallel" axis is sharded across both
    # TensorCores; if not, switch to (pltpu.CORE_PARALLEL, pltpu.ARBITRARY).
    s1, s2 = pl.pallas_call(
        _energy_kernel,
        out_shape=(
            jax.ShapeDtypeStruct((nc * _SUB, _LANE), jnp.float32),
            jax.ShapeDtypeStruct((nc * _SUB, _LANE), jnp.float32),
        ),
        grid_spec=pltpu.PrefetchScalarGridSpec(
            num_scalar_prefetch=0,
            grid=(nc, steps),
            in_specs=[in_spec, in_spec, in_spec, in_spec, z_spec],
            out_specs=[out_spec, out_spec],
        ),
        compiler_params=pltpu.CompilerParams(
            dimension_semantics=("parallel", "arbitrary"),
            vmem_limit_bytes=_VMEM_LIMIT,
        ),
    )(*ops, z2)

    # Single cross-lane/cross-sublane reduce over the tiny (nc*8, 128) partials.
    return jnp.sum(s1) / n1 + jnp.sum(s2) / n2


def energy_loss_ref(x, alpha, y, p, z):
    """Pure-JAX reference mirroring the PyTorch forward."""
    z = jax.lax.stop_gradient(jnp.broadcast_to(z[:1], y.shape))
    e1 = x * alpha
    e2 = (y + p) * (z - y) ** 2
    return e1.mean() + e2.mean()


if __name__ == "__main__":
    key = jax.random.PRNGKey(0)
    kx, ka, ky, kp, kz, kc = jax.random.split(key, 6)
    B, C, H, W = 2, 4, 16, 16
    x = jax.random.normal(kx, (B, C, H, W), dtype=jnp.float32)
    y = jax.random.normal(ky, (B, C, H, W), dtype=jnp.float32)
    p = jax.random.normal(kp, (B, C, H, W), dtype=jnp.float32)
    z = jax.random.normal(kz, (B, C, H, W), dtype=jnp.float32)
    c = jax.random.normal(kc, (B, C, H, W), dtype=jnp.float32)  # only consumed by compute_alpha
    # Stand-in for compute_alpha(z, c) (see TODO in energy_loss).
    alpha = jax.random.normal(ka, (B, C, H, W), dtype=jnp.float32)

    out = jax.block_until_ready(energy_loss(x, alpha, y, p, z))
    ref = energy_loss_ref(x, alpha, y, p, z)
    assert jnp.allclose(out, ref, rtol=1e-5, atol=1e-5), (out, ref)

    print("KERNEL_OK")
</pallas_src>

<mosaic_0001>
module attributes {stable_mosaic.version = 11 : i64} {
  func.func @_energy_kernel(%arg0: i32, %arg1: i32, %arg2: memref<8x128xf32, #tpu.memory_space<vmem>>, %arg3: memref<8x128xf32, #tpu.memory_space<vmem>>, %arg4: memref<8x128xf32, #tpu.memory_space<vmem>>, %arg5: memref<8x128xf32, #tpu.memory_space<vmem>>, %arg6: memref<8x128xf32, #tpu.memory_space<vmem>>, %arg7: memref<8x128xf32, #tpu.memory_space<vmem>>, %arg8: memref<8x128xf32, #tpu.memory_space<vmem>>) attributes {dimension_semantics = [#tpu.dimension_semantics<parallel>, #tpu.dimension_semantics<arbitrary>], iteration_bounds = array<i64: 2, 1>, scalar_prefetch = 0 : i64, scratch_operands = 0 : i64, tpu.core_type = #tpu.core_type<tc>, window_params = [{transform_indices = @transform_0, window_bounds = array<i64: 8, 128>}, {transform_indices = @transform_1, window_bounds = array<i64: 8, 128>}, {transform_indices = @transform_2, window_bounds = array<i64: 8, 128>}, {transform_indices = @transform_3, window_bounds = array<i64: 8, 128>}, {transform_indices = @transform_4, window_bounds = array<i64: 8, 128>}, {transform_indices = @transform_5, window_bounds = array<i64: 8, 128>}, {transform_indices = @transform_6, window_bounds = array<i64: 8, 128>}]} {
    %c0_i32 = arith.constant 0 : i32
    %0 = arith.cmpi eq, %arg1, %c0_i32 : i32
    %1 = arith.extui %0 : i1 to i32
    %c0_i32_0 = arith.constant 0 : i32
    %2 = arith.cmpi ne, %1, %c0_i32_0 : i32
    scf.if %2 {
      %cst_19 = arith.constant 0.000000e+00 : f32
      %23 = vector.broadcast %cst_19 : f32 to vector<8x128xf32>
      %c0_20 = arith.constant 0 : index
      %c0_21 = arith.constant 0 : index
      %24 = vector.load %arg7[%c0_20, %c0_21] : memref<8x128xf32, #tpu.memory_space<vmem>>, vector<8x128xf32>
      tpu.vector_store %arg7[%c0_20, %c0_21], %23 {strides = array<i32>} : memref<8x128xf32, #tpu.memory_space<vmem>>, vector<8x128xf32>,
      %cst_22 = arith.constant 0.000000e+00 : f32
      %25 = vector.broadcast %cst_22 : f32 to vector<8x128xf32>
      %c0_23 = arith.constant 0 : index
      %c0_24 = arith.constant 0 : index
      %26 = vector.load %arg8[%c0_23, %c0_24] : memref<8x128xf32, #tpu.memory_space<vmem>>, vector<8x128xf32>
      tpu.vector_store %arg8[%c0_23, %c0_24], %25 {strides = array<i32>} : memref<8x128xf32, #tpu.memory_space<vmem>>, vector<8x128xf32>,
    } else {
    }
    %c0 = arith.constant 0 : index
    %c0_1 = arith.constant 0 : index
    %3 = vector.load %arg2[%c0, %c0_1] : memref<8x128xf32, #tpu.memory_space<vmem>>, vector<8x128xf32>
    %c0_2 = arith.constant 0 : index
    %c0_3 = arith.constant 0 : index
    %4 = vector.load %arg3[%c0_2, %c0_3] : memref<8x128xf32, #tpu.memory_space<vmem>>, vector<8x128xf32>
    %c0_4 = arith.constant 0 : index
    %c0_5 = arith.constant 0 : index
    %5 = vector.load %arg4[%c0_4, %c0_5] : memref<8x128xf32, #tpu.memory_space<vmem>>, vector<8x128xf32>
    %c0_6 = arith.constant 0 : index
    %c0_7 = arith.constant 0 : index
    %6 = vector.load %arg5[%c0_6, %c0_7] : memref<8x128xf32, #tpu.memory_space<vmem>>, vector<8x128xf32>
    %c0_8 = arith.constant 0 : index
    %c0_9 = arith.constant 0 : index
    %7 = vector.load %arg6[%c0_8, %c0_9] : memref<8x128xf32, #tpu.memory_space<vmem>>, vector<8x128xf32>
    %8 = arith.mulf %3, %4 : vector<8x128xf32>
    %9 = arith.subf %7, %5 : vector<8x128xf32>
    %10 = arith.addf %5, %6 : vector<8x128xf32>
    %11 = arith.mulf %9, %9 : vector<8x128xf32>
    %12 = arith.mulf %10, %11 : vector<8x128xf32>
    %c0_10 = arith.constant 0 : index
    %c0_11 = arith.constant 0 : index
    %13 = vector.load %arg7[%c0_10, %c0_11] : memref<8x128xf32, #tpu.memory_space<vmem>>, vector<8x128xf32>
    %14 = vector.shape_cast %8 : vector<8x128xf32> to vector<1x8x128xf32>
    %cst = arith.constant dense<0.000000e+00> : vector<8x128xf32>
    %15 = vector.multi_reduction <add>, %14, %cst [0] : vector<1x8x128xf32> to vector<8x128xf32>
    %16 = arith.addf %13, %15 : vector<8x128xf32>
    %c0_12 = arith.constant 0 : index
    %c0_13 = arith.constant 0 : index
    %17 = vector.load %arg7[%c0_12, %c0_13] : memref<8x128xf32, #tpu.memory_space<vmem>>, vector<8x128xf32>
    tpu.vector_store %arg7[%c0_12, %c0_13], %16 {strides = array<i32>} : memref<8x128xf32, #tpu.memory_space<vmem>>, vector<8x128xf32>,
    %c0_14 = arith.constant 0 : index
    %c0_15 = arith.constant 0 : index
    %18 = vector.load %arg8[%c0_14, %c0_15] : memref<8x128xf32, #tpu.memory_space<vmem>>, vector<8x128xf32>
    %19 = vector.shape_cast %12 : vector<8x128xf32> to vector<1x8x128xf32>
    %cst_16 = arith.constant dense<0.000000e+00> : vector<8x128xf32>
    %20 = vector.multi_reduction <add>, %19, %cst_16 [0] : vector<1x8x128xf32> to vector<8x128xf32>
    %21 = arith.addf %18, %20 : vector<8x128xf32>
    %c0_17 = arith.constant 0 : index
    %c0_18 = arith.constant 0 : index
    %22 = vector.load %arg8[%c0_17, %c0_18] : memref<8x128xf32, #tpu.memory_space<vmem>>, vector<8x128xf32>
    tpu.vector_store %arg8[%c0_17, %c0_18], %21 {strides = array<i32>} : memref<8x128xf32, #tpu.memory_space<vmem>>, vector<8x128xf32>,
    return
  }
  func.func @transform_0(%arg0: i32, %arg1: i32) -> (i32, i32) {
    %c1_i32 = arith.constant 1 : i32
    %0 = arith.muli %arg0, %c1_i32 : i32
    %1 = arith.addi %0, %arg1 : i32
    %c0_i32 = arith.constant 0 : i32
    %c0_i32_0 = arith.constant 0 : i32
    return %1, %c0_i32 : i32, i32
  }
  func.func @transform_1(%arg0: i32, %arg1: i32) -> (i32, i32) {
    %c1_i32 = arith.constant 1 : i32
    %0 = arith.muli %arg0, %c1_i32 : i32
    %1 = arith.addi %0, %arg1 : i32
    %c0_i32 = arith.constant 0 : i32
    %c0_i32_0 = arith.constant 0 : i32
    return %1, %c0_i32 : i32, i32
  }
  func.func @transform_2(%arg0: i32, %arg1: i32) -> (i32, i32) {
    %c1_i32 = arith.constant 1 : i32
    %0 = arith.muli %arg0, %c1_i32 : i32
    %1 = arith.addi %0, %arg1 : i32
    %c0_i32 = arith.constant 0 : i32
    %c0_i32_0 = arith.constant 0 : i32
    return %1, %c0_i32 : i32, i32
  }
  func.func @transform_3(%arg0: i32, %arg1: i32) -> (i32, i32) {
    %c1_i32 = arith.constant 1 : i32
    %0 = arith.muli %arg0, %c1_i32 : i32
    %1 = arith.addi %0, %arg1 : i32
    %c0_i32 = arith.constant 0 : i32
    %c0_i32_0 = arith.constant 0 : i32
    return %1, %c0_i32 : i32, i32
  }
  func.func @transform_4(%arg0: i32, %arg1: i32) -> (i32, i32) {
    %c0_i32 = arith.constant 0 : i32
    %c0_i32_0 = arith.constant 0 : i32
    %c0_i32_1 = arith.constant 0 : i32
    return %c0_i32, %c0_i32_0 : i32, i32
  }
  func.func @transform_5(%arg0: i32, %arg1: i32) -> (i32, i32) {
    %c0_i32 = arith.constant 0 : i32
    %c0_i32_0 = arith.constant 0 : i32
    return %arg0, %c0_i32 : i32, i32
  }
  func.func @transform_6(%arg0: i32, %arg1: i32) -> (i32, i32) {
    %c0_i32 = arith.constant 0 : i32
    %c0_i32_0 = arith.constant 0 : i32
    return %arg0, %c0_i32 : i32, i32
  }
}

</mosaic_0001>

<llo_original>
// kernel: tpu_custom_call.1
$region0: #{tpu_custom_call.1}
  #allocation0 [shape = 'u32[]', space=smem, size = 0x4, offset = 0x4, fixed_abs, tag = 'smem constant byte address 0x4 - core index']
  #allocation1 [shape = 'u32[144,128]{1,0:T(1,128)}', space=vmem, size = 0x12000, scoped, tag = 'internal scratch']
  %s0 = inlined_call_operand.hbm [shape: f32[16,128], index: 0, kind: input, shape index: {}]
  %s1 = inlined_call_operand.hbm [shape: f32[16,128], index: 1, kind: input, shape index: {}]
  %s2 = inlined_call_operand.hbm [shape: f32[16,128], index: 2, kind: input, shape index: {}]
  %s3 = inlined_call_operand.hbm [shape: f32[16,128], index: 3, kind: input, shape index: {}]
  %s4 = inlined_call_operand.hbm [shape: f32[16,128], index: 4, kind: input, shape index: {}]
  %s5 = inlined_call_operand.hbm [shape: f32[16,128], index: 5, kind: output, shape index: {0}]
  %s6 = inlined_call_operand.hbm [shape: f32[16,128], index: 6, kind: output, shape index: {1}]
  %7 = xla_tuple %s5, %s6
  %s8 = sld [smem:[#allocation0]]
  $region85: #{tpu_custom_call.1} parent=0
    _
  %s10 = ssub.s32 1, %s8
  %s11 = scalar_select 0, %s10, %s8
  $region1: #{tpu_custom_call.1} parent=0
    #allocation2 [shape = 'u8[8192]{0}', space=vmem, size = 0x2000, scoped, tag = 'input window, operand 0']
    #allocation3 [shape = 's32[2]{0}', space=sflag, size = 0x8, scoped, tag = 'scoped memory for tpu_custom_call.1']
    #allocation4 [shape = 's32[2]{0}', space=sflag, size = 0x8, scoped, tag = 'scoped memory for tpu_custom_call.1']
    #allocation5 [shape = 'u8[8192]{0}', space=vmem, size = 0x2000, scoped, tag = 'input window, operand 1']
    #allocation6 [shape = 's32[2]{0}', space=sflag, size = 0x8, scoped, tag = 'scoped memory for tpu_custom_call.1']
    #allocation7 [shape = 'u8[8192]{0}', space=vmem, size = 0x2000, scoped, tag = 'input window, operand 2']
    #allocation8 [shape = 'u8[8192]{0}', space=vmem, size = 0x2000, scoped, tag = 'input window, operand 3']
    #allocation9 [shape = 's32[2]{0}', space=sflag, size = 0x8, scoped, tag = 'scoped memory for tpu_custom_call.1']
    #allocation10 [shape = 'u8[4096]{0}', space=vmem, size = 0x1000, scoped, tag = 'input window, operand 4, single buffered']
    #allocation11 [shape = 'u8[8192]{0}', space=vmem, size = 0x2000, scoped, tag = 'output window, operand 0']
    #allocation12 [shape = 'u8[8192]{0}', space=vmem, size = 0x2000, scoped, tag = 'output window, operand 1']
    #allocation13 [shape = 's32[2]{0}', space=sflag, size = 0x8, scoped, tag = 'scoped memory for tpu_custom_call.1']
    %12 = vsyncpa [#allocation3], 0
    %s13 = scalar_lea.sflag [#allocation3], 1
    %14 = vsyncpa %s13, 0
    %15 = vsyncpa [#allocation6], 0
    %s16 = scalar_lea.sflag [#allocation6], 1
    %17 = vsyncpa %s16, 0
    %18 = vsyncpa [#allocation9], 0
    %s19 = scalar_lea.sflag [#allocation9], 1
    %20 = vsyncpa %s19, 0
    %21 = vsyncpa [#allocation4], 0
    %s22 = scalar_lea.sflag [#allocation4], 1
    %23 = vsyncpa %s22, 0
    %24 = vsyncpa [#allocation13], 0
    %s25 = scalar_lea.sflag [#allocation13], 1
    %26 = vsyncpa %s25, 0
    loop: start=0, step=1, limit=4
    $region2: #{tpu_custom_call.1} parent=1 // loop_pre_header
      _
    $region3: #{tpu_custom_call.1} parent=1 // loop_header
      %s28 = sphi 0, %s32
      %p29 = scmp.ge.s32.totalorder %s28, 4
      %s35 = sphi 0, %s47
      %s36 = sphi 0, %s43
      %s37 = sphi 0, %s35
      %s38 = sphi 0, %s36
      %s39 = sphi 0, %s37
      %s40 = sphi 0, %s38
      %s52 = sphi 0, %s54
      %s55 = sphi 0, %s52
      %s56 = sphi 0, %s55
      %s72 = sphi 0, %s56
      %s80 = sphi 0, %s82
      %s83 = sphi 0, %s80
      %s84 = sphi 0, %s83
      %s100 = sphi 0, %s84
      %s108 = sphi 0, %s110
      %s111 = sphi 0, %s108
      %s112 = sphi 0, %s111
      %s128 = sphi 0, %s112
      %s136 = sphi 0, %s138
      %s139 = sphi 0, %s136
      %s140 = sphi 0, %s139
      %s156 = sphi 0, %s140
      %s160 = sphi 0, %s160
      %s162 = sphi 0, %s160
      %s163 = sphi 0, %s162
      %s177 = sphi 0, %s163
      %s183 = sphi 0, %s185
      %s186 = sphi 0, %s183
      %s187 = sphi 0, %s186
      %s203 = sphi 0, %s187
      %s209 = sphi 0, %s211
      %s212 = sphi 0, %s209
      %s213 = sphi 0, %s212
      %s229 = sphi 0, %s213
    $region4: #{tpu_custom_call.1} parent=1 // loop_header_branch
      %31 = sbr.rel (%p29) target = $region8
    $region5: #{tpu_custom_call.1} parent=1 // loop_body
      %s33 = ssub.s32 %s28, 1
      %s34 = ssub.s32 %s28, 2
      %s41 = sadd.s32 1, %s36
      %p42 = scmp.ge.s32.totalorder %s41, 1
      %s43 = scalar_select %p42, 0, %s41
      %s44 = sadd.s32 1, %s35
      %s45 = scalar_select %p42, %s44, %s35
      %p46 = scmp.ge.s32.totalorder %s45, 2
      %s47 = scalar_select %p46, 0, %s45
      %s48 = sadd.s32 %s35, %s36
      %s49 = sadd.s32 %s47, %s43
      %s50 = ssub.s32 %s48, %s49
      %p51 = scmp.eq.s32.totalorder %s50, 0
      %s53 = sadd.s32 %s52, 1
      %s54 = scalar_select %p51, %s52, %s53
      %p57 = pneg %p51
      %p58 = scmp.eq.s32.totalorder %s28, 1
      %p59 = por %p57, %p58
      %p60 = scmp.ne.s32.totalorder %s52, %s55
      %p61 = scmp.eq.s32.totalorder %s28, 0
      %p62 = por %p60, %p61
      %p63 = scmp.ne.s32.totalorder %s52, %s55
      %p64 = scmp.eq.s32.totalorder %s33, 1
      %p65 = por %p63, %p64
      %p66 = scmp.ne.s32.totalorder %s55, %s56
      %p67 = scmp.eq.s32.totalorder %s33, 0
      %p68 = por %p66, %p67
      %p69 = scmp.ne.s32.totalorder %s55, %s56
      %p70 = scmp.eq.s32.totalorder %s34, 1
      %p71 = por %p69, %p70
      %p73 = scmp.ne.s32.totalorder %s56, %s72
      %p74 = scmp.eq.s32.totalorder %s34, 0
      %p75 = por %p73, %p74
      %s76 = sadd.s32 %s35, %s36
      %s77 = sadd.s32 %s47, %s43
      %s78 = ssub.s32 %s76, %s77
      %p79 = scmp.eq.s32.totalorder %s78, 0
      %s81 = sadd.s32 %s80, 1
      %s82 = scalar_select %p79, %s80, %s81
      %p85 = pneg %p79
      %p86 = scmp.eq.s32.totalorder %s28, 1
      %p87 = por %p85, %p86
      %p88 = scmp.ne.s32.totalorder %s80, %s83
      %p89 = scmp.eq.s32.totalorder %s28, 0
      %p90 = por %p88, %p89
      %p91 = scmp.ne.s32.totalorder %s80, %s83
      %p92 = scmp.eq.s32.totalorder %s33, 1
      %p93 = por %p91, %p92
      %p94 = scmp.ne.s32.totalorder %s83, %s84
      %p95 = scmp.eq.s32.totalorder %s33, 0
      %p96 = por %p94, %p95
      %p97 = scmp.ne.s32.totalorder %s83, %s84
      %p98 = scmp.eq.s32.totalorder %s34, 1
      %p99 = por %p97, %p98
      %p101 = scmp.ne.s32.totalorder %s84, %s100
      %p102 = scmp.eq.s32.totalorder %s34, 0
      %p103 = por %p101, %p102
      %s104 = sadd.s32 %s35, %s36
      %s105 = sadd.s32 %s47, %s43
      %s106 = ssub.s32 %s104, %s105
      %p107 = scmp.eq.s32.totalorder %s106, 0
      %s109 = sadd.s32 %s108, 1
      %s110 = scalar_select %p107, %s108, %s109
      %p113 = pneg %p107
      %p114 = scmp.eq.s32.totalorder %s28, 1
      %p115 = por %p113, %p114
      %p116 = scmp.ne.s32.totalorder %s108, %s111
      %p117 = scmp.eq.s32.totalorder %s28, 0
      %p118 = por %p116, %p117
      %p119 = scmp.ne.s32.totalorder %s108, %s111
      %p120 = scmp.eq.s32.totalorder %s33, 1
      %p121 = por %p119, %p120
      %p122 = scmp.ne.s32.totalorder %s111, %s112
      %p123 = scmp.eq.s32.totalorder %s33, 0
      %p124 = por %p122, %p123
      %p125 = scmp.ne.s32.totalorder %s111, %s112
      %p126 = scmp.eq.s32.totalorder %s34, 1
      %p127 = por %p125, %p126
      %p129 = scmp.ne.s32.totalorder %s112, %s128
      %p130 = scmp.eq.s32.totalorder %s34, 0
      %p131 = por %p129, %p130
      %s132 = sadd.s32 %s35, %s36
      %s133 = sadd.s32 %s47, %s43
      %s134 = ssub.s32 %s132, %s133
      %p135 = scmp.eq.s32.totalorder %s134, 0
      %s137 = sadd.s32 %s136, 1
      %s138 = scalar_select %p135, %s136, %s137
      %p141 = pneg %p135
      %p142 = scmp.eq.s32.totalorder %s28, 1
      %p143 = por %p141, %p142
      %p144 = scmp.ne.s32.totalorder %s136, %s139
      %p145 = scmp.eq.s32.totalorder %s28, 0
      %p146 = por %p144, %p145
      %p147 = scmp.ne.s32.totalorder %s136, %s139
      %p148 = scmp.eq.s32.totalorder %s33, 1
      %p149 = por %p147, %p148
      %p150 = scmp.ne.s32.totalorder %s139, %s140
      %p151 = scmp.eq.s32.totalorder %s33, 0
      %p152 = por %p150, %p151
      %p153 = scmp.ne.s32.totalorder %s139, %s140
      %p154 = scmp.eq.s32.totalorder %s34, 1
      %p155 = por %p153, %p154
      %p157 = scmp.ne.s32.totalorder %s140, %s156
      %p158 = scmp.eq.s32.totalorder %s34, 0
      %p159 = por %p157, %p158
      %s161 = sadd.s32 %s160, 1
      %p164 = scmp.eq.s32.totalorder %s28, 1
      %p165 = scmp.ne.s32.totalorder %s160, %s162
      %p166 = scmp.eq.s32.totalorder %s28, 0
      %p167 = por %p165, %p166
      %p168 = scmp.ne.s32.totalorder %s160, %s162
      %p169 = scmp.eq.s32.totalorder %s33, 1
      %p170 = por %p168, %p169
      %p171 = scmp.ne.s32.totalorder %s162, %s163
      %p172 = scmp.eq.s32.totalorder %s33, 0
      %p173 = por %p171, %p172
      %p174 = scmp.ne.s32.totalorder %s162, %s163
      %p175 = scmp.eq.s32.totalorder %s34, 1
      %p176 = por %p174, %p175
      %p178 = scmp.ne.s32.totalorder %s163, %s177
      %p179 = scmp.eq.s32.totalorder %s34, 0
      %p180 = por %p178, %p179
      %s181 = ssub.s32 %s35, %s47
      %p182 = scmp.eq.s32.totalorder %s181, 0
      %s184 = sadd.s32 %s183, 1
      %s185 = scalar_select %p182, %s183, %s184
      %p188 = pneg %p182
      %p189 = scmp.eq.s32.totalorder %s28, 1
      %p190 = por %p188, %p189
      %p191 = scmp.ne.s32.totalorder %s183, %s186
      %p192 = scmp.eq.s32.totalorder %s28, 0
      %p193 = por %p191, %p192
      %p194 = scmp.ne.s32.totalorder %s183, %s186
      %p195 = scmp.eq.s32.totalorder %s33, 1
      %p196 = por %p194, %p195
      %p197 = scmp.ne.s32.totalorder %s186, %s187
      %p198 = scmp.eq.s32.totalorder %s33, 0
      %p199 = por %p197, %p198
      %p200 = scmp.ne.s32.totalorder %s186, %s187
      %p201 = scmp.eq.s32.totalorder %s34, 1
      %p202 = por %p200, %p201
      %p204 = scmp.ne.s32.totalorder %s187, %s203
      %p205 = scmp.eq.s32.totalorder %s34, 0
      %p206 = por %p204, %p205
      %s207 = ssub.s32 %s35, %s47
      %p208 = scmp.eq.s32.totalorder %s207, 0
      %s210 = sadd.s32 %s209, 1
      %s211 = scalar_select %p208, %s209, %s210
      %p214 = pneg %p208
      %p215 = scmp.eq.s32.totalorder %s28, 1
      %p216 = por %p214, %p215
      %p217 = scmp.ne.s32.totalorder %s209, %s212
      %p218 = scmp.eq.s32.totalorder %s28, 0
      %p219 = por %p217, %p218
      %p220 = scmp.ne.s32.totalorder %s209, %s212
      %p221 = scmp.eq.s32.totalorder %s33, 1
      %p222 = por %p220, %p221
      %p223 = scmp.ne.s32.totalorder %s212, %s213
      %p224 = scmp.eq.s32.totalorder %s33, 0
      %p225 = por %p223, %p224
      %p226 = scmp.ne.s32.totalorder %s212, %s213
      %p227 = scmp.eq.s32.totalorder %s34, 1
      %p228 = por %p226, %p227
      %p230 = scmp.ne.s32.totalorder %s213, %s229
      %p231 = scmp.eq.s32.totalorder %s34, 0
      %p232 = por %p230, %p231
      %p233 = scmp.le.s32.totalorder 1, %s28
      %p234 = scmp.lt.s32.totalorder %s28, 3
      %p235 = pnand %p233, %p234
      %p236 = pneg %p235
      // Predicated region
      $region9: #{tpu_custom_call.1} parent=5 // pred_check
        _
      $region10: #{tpu_custom_call.1} parent=5 // pred_check_branch
        %238 = sbr.rel (%p235) target = $region12
      $region11: #{tpu_custom_call.1} parent=5 // pred_region
        %s239 = ssub.s32 %s28, 1
        // Predicated region
        $region13: #{tpu_custom_call.1} parent=11 // pred_check
          %p240 = pneg %p173
        $region14: #{tpu_custom_call.1} parent=11 // pred_check_branch
          %242 = sbr.rel (%p240) target = $region16
        $region15: #{tpu_custom_call.1} parent=11 // pred_region
          %s244 = ssub.s32 128, 128
          %245 = vsyncadd [#allocation9], %s244
          %s247 = sshll.u32 [#allocation10], 4
          %s248 = int_to_ptr.vmem [resolvable:$true] %s247
          %250 = dma.hbm_to_vmem [thread:$0]  %s4, 128, %s248, [#allocation9]
        $region16: #{tpu_custom_call.1} parent=11 // pred_fallthru
          _
      $region12: #{tpu_custom_call.1} parent=5 // pred_fallthru
        _
      %p251 = scmp.lt.s32.totalorder %s28, 2
      // Predicated region
      $region17: #{tpu_custom_call.1} parent=5 // pred_check
        %p252 = pneg %p251
      $region18: #{tpu_custom_call.1} parent=5 // pred_check_branch
        %254 = sbr.rel (%p252) target = $region20
      $region19: #{tpu_custom_call.1} parent=5 // pred_region
        // Predicated region
        $region21: #{tpu_custom_call.1} parent=19 // pred_check
          %p255 = pneg %p62
        $region22: #{tpu_custom_call.1} parent=19 // pred_check_branch
          %257 = sbr.rel (%p255) target = $region24
        $region23: #{tpu_custom_call.1} parent=19 // pred_region
          %s258 = sand.u32 %s52, 1
          %s259 = scalar_lea.sflag [#allocation3], %s258
          %s260 = sand.u32 %s52, 1
          %s261 = smul.addr %s260, 8
          %s262 = scalar_lea.vmem [#allocation2], %s261
          %s263 = sadd.s32 %s35, %s36
          %s265 = ssub.s32 128, 128
          %266 = vsyncadd %s259, %s265
          %s267 = smul.addr %s263, 128
          %s268 = scalar_lea.hbm %s0, %s267
          %s270 = sshll.u32 %s262, 4
          %s271 = int_to_ptr.vmem [resolvable:$true] %s270
          %273 = dma.hbm_to_vmem [thread:$0]  %s268, 128, %s271, %s259
        $region24: #{tpu_custom_call.1} parent=19 // pred_fallthru
          _
        // Predicated region
        $region25: #{tpu_custom_call.1} parent=19 // pred_check
          %p274 = pneg %p90
        $region26: #{tpu_custom_call.1} parent=19 // pred_check_branch
          %276 = sbr.rel (%p274) target = $region28
        $region27: #{tpu_custom_call.1} parent=19 // pred_region
          %s277 = sand.u32 %s28, 1
          %s278 = scalar_lea.sflag [#allocation6], %s277
          %s279 = sand.u32 %s80, 1
          %s280 = smul.addr %s279, 8
          %s281 = scalar_lea.vmem [#allocation5], %s280
          %s282 = sadd.s32 %s35, %s36
          %s284 = ssub.s32 128, 128
          %285 = vsyncadd %s278, %s284
          %s286 = smul.addr %s282, 128
          %s287 = scalar_lea.hbm %s1, %s286
          %s289 = sshll.u32 %s281, 4
          %s290 = int_to_ptr.vmem [resolvable:$true] %s289
          %292 = dma.hbm_to_vmem [thread:$0]  %s287, 128, %s290, %s278
        $region28: #{tpu_custom_call.1} parent=19 // pred_fallthru
          _
        // Predicated region
        $region29: #{tpu_custom_call.1} parent=19 // pred_check
          %p293 = pneg %p118
        $region30: #{tpu_custom_call.1} parent=19 // pred_check_branch
          %295 = sbr.rel (%p293) target = $region32
        $region31: #{tpu_custom_call.1} parent=19 // pred_region
          %s296 = sand.u32 %s28, 1
          %s297 = scalar_lea.sflag [#allocation6], %s296
          %s298 = sand.u32 %s108, 1
          %s299 = smul.addr %s298, 8
          %s300 = scalar_lea.vmem [#allocation7], %s299
          %s301 = sadd.s32 %s35, %s36
          %s303 = ssub.s32 128, 128
          %304 = vsyncadd %s297, %s303
          %s305 = smul.addr %s301, 128
          %s306 = scalar_lea.hbm %s2, %s305
          %s308 = sshll.u32 %s300, 4
          %s309 = int_to_ptr.vmem [resolvable:$true] %s308
          %311 = dma.hbm_to_vmem [thread:$0]  %s306, 128, %s309, %s297
        $region32: #{tpu_custom_call.1} parent=19 // pred_fallthru
          _
        // Predicated region
        $region33: #{tpu_custom_call.1} parent=19 // pred_check
          %p312 = pneg %p146
        $region34: #{tpu_custom_call.1} parent=19 // pred_check_branch
          %314 = sbr.rel (%p312) target = $region36
        $region35: #{tpu_custom_call.1} parent=19 // pred_region
          %s315 = sand.u32 %s28, 1
          %s316 = scalar_lea.sflag [#allocation9], %s315
          %s317 = sand.u32 %s136, 1
          %s318 = smul.addr %s317, 8
          %s319 = scalar_lea.vmem [#allocation8], %s318
          %s320 = sadd.s32 %s35, %s36
          %s322 = ssub.s32 128, 128
          %323 = vsyncadd %s316, %s322
          %s324 = smul.addr %s320, 128
          %s325 = scalar_lea.hbm %s3, %s324
          %s327 = sshll.u32 %s319, 4
          %s328 = int_to_ptr.vmem [resolvable:$true] %s327
          %330 = dma.hbm_to_vmem [thread:$0]  %s325, 128, %s328, %s316
        $region36: #{tpu_custom_call.1} parent=19 // pred_fallthru
          _
      $region20: #{tpu_custom_call.1} parent=5 // pred_fallthru
        _
      %p331 = scmp.le.s32.totalorder 1, %s28
      %p332 = scmp.lt.s32.totalorder %s28, 3
      %p333 = pnand %p331, %p332
      %p334 = pneg %p333
      // Predicated region
      $region37: #{tpu_custom_call.1} parent=5 // pred_check
        _
      $region38: #{tpu_custom_call.1} parent=5 // pred_check_branch
        %336 = sbr.rel (%p333) target = $region40
      $region39: #{tpu_custom_call.1} parent=5 // pred_region
        %s337 = ssub.s32 %s28, 1
        %s338 = sand.u32 %s55, 1
        %s339 = scalar_lea.sflag [#allocation3], %s338
        %s340 = sand.u32 %s55, 1
        %s341 = smul.addr %s340, 8
        %s342 = scalar_lea.vmem [#allocation2], %s341
        // Predicated region
        $region41: #{tpu_custom_call.1} parent=39 // pred_check
          %p343 = pneg %p68
        $region42: #{tpu_custom_call.1} parent=39 // pred_check_branch
          %345 = sbr.rel (%p343) target = $region44
        $region43: #{tpu_custom_call.1} parent=39 // pred_region
          %346 = dma.done %s339, 128
        $region44: #{tpu_custom_call.1} parent=39 // pred_fallthru
          _
        %s347 = sand.u32 %s33, 1
        %s348 = scalar_lea.sflag [#allocation6], %s347
        %s349 = sand.u32 %s83, 1
        %s350 = smul.addr %s349, 8
        %s351 = scalar_lea.vmem [#allocation5], %s350
        // Predicated region
        $region45: #{tpu_custom_call.1} parent=39 // pred_check
          %p352 = pneg %p96
        $region46: #{tpu_custom_call.1} parent=39 // pred_check_branch
          %354 = sbr.rel (%p352) target = $region48
        $region47: #{tpu_custom_call.1} parent=39 // pred_region
          %355 = dma.done %s348, 128
        $region48: #{tpu_custom_call.1} parent=39 // pred_fallthru
          _
        %s356 = sand.u32 %s33, 1
        %s357 = scalar_lea.sflag [#allocation6], %s356
        %s358 = sand.u32 %s111, 1
        %s359 = smul.addr %s358, 8
        %s360 = scalar_lea.vmem [#allocation7], %s359
        // Predicated region
        $region49: #{tpu_custom_call.1} parent=39 // pred_check
          %p361 = pneg %p124
        $region50: #{tpu_custom_call.1} parent=39 // pred_check_branch
          %363 = sbr.rel (%p361) target = $region52
        $region51: #{tpu_custom_call.1} parent=39 // pred_region
          %364 = dma.done %s357, 128
        $region52: #{tpu_custom_call.1} parent=39 // pred_fallthru
          _
        %s365 = sand.u32 %s33, 1
        %s366 = scalar_lea.sflag [#allocation9], %s365
        %s367 = sand.u32 %s139, 1
        %s368 = smul.addr %s367, 8
        %s369 = scalar_lea.vmem [#allocation8], %s368
        // Predicated region
        $region53: #{tpu_custom_call.1} parent=39 // pred_check
          %p370 = pneg %p152
        $region54: #{tpu_custom_call.1} parent=39 // pred_check_branch
          %372 = sbr.rel (%p370) target = $region56
        $region55: #{tpu_custom_call.1} parent=39 // pred_region
          %373 = dma.done %s366, 128
        $region56: #{tpu_custom_call.1} parent=39 // pred_fallthru
          _
        // Predicated region
        $region57: #{tpu_custom_call.1} parent=39 // pred_check
          %p374 = pneg %p173
        $region58: #{tpu_custom_call.1} parent=39 // pred_check_branch
          %376 = sbr.rel (%p374) target = $region60
        $region59: #{tpu_custom_call.1} parent=39 // pred_region
          %377 = dma.done [#allocation9], 128
        $region60: #{tpu_custom_call.1} parent=39 // pred_fallthru
          _
        %s378 = sand.u32 %s55, 1
        %s379 = scalar_lea.sflag [#allocation3], %s378
        %s380 = sand.u32 %s55, 1
        %s381 = smul.addr %s380, 8
        %s382 = scalar_lea.vmem [#allocation2], %s381
        %p383 = pneg %p68
        %p384 = pneg %p65
        %s385 = sand.u32 %s33, 1
        %s386 = scalar_lea.sflag [#allocation6], %s385
        %s387 = sand.u32 %s83, 1
        %s388 = smul.addr %s387, 8
        %s389 = scalar_lea.vmem [#allocation5], %s388
        %p390 = pneg %p96
        %p391 = pneg %p93
        %s392 = sand.u32 %s33, 1
        %s393 = scalar_lea.sflag [#allocation6], %s392
        %s394 = sand.u32 %s111, 1
        %s395 = smul.addr %s394, 8
        %s396 = scalar_lea.vmem [#allocation7], %s395
        %p397 = pneg %p124
        %p398 = pneg %p121
        %s399 = sand.u32 %s33, 1
        %s400 = scalar_lea.sflag [#allocation9], %s399
        %s401 = sand.u32 %s139, 1
        %s402 = smul.addr %s401, 8
        %s403 = scalar_lea.vmem [#allocation8], %s402
        %p404 = pneg %p152
        %p405 = pneg %p149
        %p406 = pneg %p173
        %p407 = pneg %p170
        %p408 = pneg %p199
        %p409 = pneg %p196
        %s410 = sand.u32 %s186, 1
        %s411 = scalar_lea.sflag [#allocation4], %s410
        %s412 = sand.u32 %s186, 1
        %s413 = smul.addr %s412, 8
        %s414 = scalar_lea.vmem [#allocation11], %s413
        %p415 = pneg %p225
        %p416 = pneg %p222
        %s417 = sand.u32 %s212, 1
        %s418 = scalar_lea.sflag [#allocation13], %s417
        %s419 = sand.u32 %s212, 1
        %s420 = smul.addr %s419, 8
        %s421 = scalar_lea.vmem [#allocation12], %s420
        %s422 = sadd.s32 %s37, %s38
        %s423 = sadd.s32 %s37, %s38
        %s424 = sadd.s32 %s37, %s38
        %s425 = sadd.s32 %s37, %s38
        %p426 = scmp.eq.s32.totalorder %s38, 0
        // Predicated region
        $region61: #{tpu_custom_call.1} parent=39 // pred_check
          %p427 = pneg %p426
        $region62: #{tpu_custom_call.1} parent=39 // pred_check_branch
          %429 = sbr.rel (%p427) target = $region64
        $region63: #{tpu_custom_call.1} parent=39 // pred_region
          %430 = vst [vmem:[%s414] sm:$0xff] 0.0
          %431 = vst [vmem:[%s421] sm:$0xff] 0.0
        $region64: #{tpu_custom_call.1} parent=39 // pred_fallthru
          _
        %v432 = vld [vmem:[%s342] sm:$0xff]
        %v433 = vld [vmem:[%s351] sm:$0xff]
        %v434 = vld [vmem:[%s360] sm:$0xff]
        %v435 = vld [vmem:[%s369] sm:$0xff]
        %v436 = vld [vmem:[#allocation10] sm:$0xff]
        %v437 = vmul.f32 %v432, %v433
        %v438 = vsub.f32 %v436, %v434
        %v439 = vadd.f32 %v434, %v435
        %v440 = vmul.f32 %v438, %v438
        %v441 = vmul.f32 %v439, %v440
        %v442 = vld [vmem:[%s414] sm:$0xff]
        %v443 = vadd.f32 %v437, 0.0
        %v444 = vadd.f32 %v442, %v443
        %445 = vst [vmem:[%s414] sm:$0xff] %v444
        %v446 = vld [vmem:[%s421] sm:$0xff]
        %v447 = vadd.f32 %v441, 0.0
        %v448 = vadd.f32 %v446, %v447
        %449 = vst [vmem:[%s421] sm:$0xff] %v448
        %s450 = sand.u32 %s186, 1
        %s451 = scalar_lea.sflag [#allocation4], %s450
        %s452 = sand.u32 %s186, 1
        %s453 = smul.addr %s452, 8
        %s454 = scalar_lea.vmem [#allocation11], %s453
        %s455 = sand.u32 %s212, 1
        %s456 = scalar_lea.sflag [#allocation13], %s455
        %s457 = sand.u32 %s212, 1
        %s458 = smul.addr %s457, 8
        %s459 = scalar_lea.vmem [#allocation12], %s458
        // Predicated region
        $region65: #{tpu_custom_call.1} parent=39 // pred_check
          %p460 = pneg %p196
        $region66: #{tpu_custom_call.1} parent=39 // pred_check_branch
          %462 = sbr.rel (%p460) target = $region68
        $region67: #{tpu_custom_call.1} parent=39 // pred_region
          %s464 = ssub.s32 128, 128
          %465 = vsyncadd %s451, %s464
          %s466 = smul.addr %s37, 128
          %s467 = scalar_lea.hbm %s5, %s466
          %s469 = sshll.u32 %s454, 4
          %s470 = int_to_ptr.vmem [resolvable:$true] %s469
          %472 = dma.vmem_to_hbm [thread:$0]  %s470, 128, %s467, %s451
        $region68: #{tpu_custom_call.1} parent=39 // pred_fallthru
          _
        // Predicated region
        $region69: #{tpu_custom_call.1} parent=39 // pred_check
          %p473 = pneg %p222
        $region70: #{tpu_custom_call.1} parent=39 // pred_check_branch
          %475 = sbr.rel (%p473) target = $region72
        $region71: #{tpu_custom_call.1} parent=39 // pred_region
          %s477 = ssub.s32 128, 128
          %478 = vsyncadd %s456, %s477
          %s479 = smul.addr %s37, 128
          %s480 = scalar_lea.hbm %s6, %s479
          %s482 = sshll.u32 %s459, 4
          %s483 = int_to_ptr.vmem [resolvable:$true] %s482
          %485 = dma.vmem_to_hbm [thread:$0]  %s483, 128, %s480, %s456
        $region72: #{tpu_custom_call.1} parent=39 // pred_fallthru
          _
      $region40: #{tpu_custom_call.1} parent=5 // pred_fallthru
        _
      %p486 = scmp.le.s32.totalorder 2, %s28
      // Predicated region
      $region73: #{tpu_custom_call.1} parent=5 // pred_check
        %p487 = pneg %p486
      $region74: #{tpu_custom_call.1} parent=5 // pred_check_branch
        %489 = sbr.rel (%p487) target = $region76
      $region75: #{tpu_custom_call.1} parent=5 // pred_region
        %s490 = ssub.s32 %s28, 2
        // Predicated region
        $region77: #{tpu_custom_call.1} parent=75 // pred_check
          %p491 = pneg %p202
        $region78: #{tpu_custom_call.1} parent=75 // pred_check_branch
          %493 = sbr.rel (%p491) target = $region80
        $region79: #{tpu_custom_call.1} parent=75 // pred_region
          %s494 = sand.u32 %s187, 1
          %s495 = scalar_lea.sflag [#allocation4], %s494
          %s496 = sand.u32 %s187, 1
          %s497 = smul.addr %s496, 8
          %s498 = scalar_lea.vmem [#allocation11], %s497
          %499 = dma.done %s495, 128
        $region80: #{tpu_custom_call.1} parent=75 // pred_fallthru
          _
        // Predicated region
        $region81: #{tpu_custom_call.1} parent=75 // pred_check
          %p500 = pneg %p228
        $region82: #{tpu_custom_call.1} parent=75 // pred_check_branch
          %502 = sbr.rel (%p500) target = $region84
        $region83: #{tpu_custom_call.1} parent=75 // pred_region
          %s503 = sand.u32 %s213, 1
          %s504 = scalar_lea.sflag [#allocation13], %s503
          %s505 = sand.u32 %s213, 1
          %s506 = smul.addr %s505, 8
          %s507 = scalar_lea.vmem [#allocation12], %s506
          %508 = dma.done %s504, 128
        $region84: #{tpu_custom_call.1} parent=75 // pred_fallthru
          _
      $region76: #{tpu_custom_call.1} parent=5 // pred_fallthru
        _
    $region6: #{tpu_custom_call.1} parent=1 // loop_footer
      %s32 = sadd.s32 1, %s28
    $region7: #{tpu_custom_call.1} parent=1 // loop_footer_branch
      %27 = sbr.rel target = $region3
    $region8: #{tpu_custom_call.1} parent=1 // loop_exit
      _
    %509 = vsyncpa [#allocation3], 1
    %s510 = scalar_lea.sflag [#allocation3], 1
    %511 = vsyncpa %s510, 1
    %512 = vsyncpa [#allocation6], 1
    %s513 = scalar_lea.sflag [#allocation6], 1
    %514 = vsyncpa %s513, 1
    %515 = vsyncpa [#allocation9], 1
    %s516 = scalar_lea.sflag [#allocation9], 1
    %517 = vsyncpa %s516, 1
    %518 = vsyncpa [#allocation4], 1
    %s519 = scalar_lea.sflag [#allocation4], 1
    %520 = vsyncpa %s519, 1
    %521 = vsyncpa [#allocation13], 1
    %s522 = scalar_lea.sflag [#allocation13], 1
    %523 = vsyncpa %s522, 1

</llo_original>
